<compile_context>
chip_gen: v6e
topology: v6e:2x2x1
jax: 0.10.0
libtpu: 0.0.40
codegen_flags: <defaults>
</compile_context>

<pallas_src>
import functools

import jax
import jax.numpy as jnp
from jax.experimental import pallas as pl
from jax.experimental.pallas import tpu as pltpu

IN_FEATURES = 20
NUM_UNITS = 30
NUM_CLASSES = 2


def _round_up(x, m):
    return ((x + m - 1) // m) * m


def classifier_kernel(x_ref, w0_ref, b0_ref, w1_ref, b1_ref, w2_ref, b2_ref, o_ref):
    """Fused MLP forward on a (features, TB) batch tile.

    x_ref:  (20, TB)           batch on the 128-lane axis
    w*_ref: (out, in)          PyTorch weight layout, kept VMEM-resident
    b*_ref: (out, 1)           broadcasts across lanes
    o_ref:  (2, TB)            lane-dense softmax probabilities
    """
    x = x_ref[...]  # (20, TB) f32

    # dense0 + ReLU : (30, 20) @ (20, TB) -> (30, TB)
    h0 = jnp.dot(w0_ref[...], x, preferred_element_type=jnp.float32) + b0_ref[...]
    h0 = jnp.maximum(h0, 0.0)

    # Dropout: nn.Dropout in eval / inference mode is the identity.
    # TODO(synk): training-mode stochastic dropout (pltpu.prng_seed +
    # pltpu.prng_random_bits mask + 1/(1-p) scaling) not emitted.

    # dense1 + ReLU : (30, 30) @ (30, TB) -> (30, TB)
    h1 = jnp.dot(w1_ref[...], h0, preferred_element_type=jnp.float32) + b1_ref[...]
    h1 = jnp.maximum(h1, 0.0)

    # output projection : (2, 30) @ (30, TB) -> (2, TB)
    logits = jnp.dot(w2_ref[...], h1, preferred_element_type=jnp.float32) + b2_ref[...]

    # 2-class softmax == sigmoid of the logit difference.
    #   p1 = exp(l1) / (exp(l0) + exp(l1)) = sigmoid(l1 - l0);  p0 = 1 - p1
    # Avoids the cross-lane max/sum reduces of a generic softmax entirely.
    diff = logits[1:2, :] - logits[0:1, :]          # (1, TB)
    p1 = 1.0 / (1.0 + jnp.exp(-diff))               # EUP exp, lane-dense
    o_ref[...] = jnp.concatenate([1.0 - p1, p1], axis=0)


@functools.partial(jax.jit, static_argnames=("tb",))
def classifier_forward(x, params, *, tb=None):
    """x: (B, 20) float32; params: PyTorch-layout weights (out, in) / biases (out, 1)."""
    B = x.shape[0]
    if tb is None:
        # Lane-aligned tile; kept modest so double-buffered tiles fit the
        # smallest scoped-VMEM default (v5e 16 MiB, v7x 32 MiB).
        tb = min(1024, _round_up(B, 128))
    Bp = _round_up(B, tb)

    # Layout plumbing (not kernel work): batch onto the lane axis, pad batch.
    x_t = jnp.transpose(x)                                   # (20, B)
    if Bp != B:
        x_t = jnp.pad(x_t, ((0, 0), (0, Bp - B)))            # (20, Bp)

    param_bytes = 4 * (
        NUM_UNITS * IN_FEATURES + NUM_UNITS
        + NUM_UNITS * NUM_UNITS + NUM_UNITS
        + NUM_CLASSES * NUM_UNITS + NUM_CLASSES
    )
    cost = pl.CostEstimate(
        flops=2 * Bp * (IN_FEATURES * NUM_UNITS
                        + NUM_UNITS * NUM_UNITS
                        + NUM_UNITS * NUM_CLASSES),
        transcendentals=Bp,                                   # one sigmoid per sample
        bytes_accessed=Bp * (IN_FEATURES + NUM_CLASSES) * 4 + param_bytes,
    )

    const_spec = lambda shape: pl.BlockSpec(shape, lambda i: (0, 0))

    out_t = pl.pallas_call(
        classifier_kernel,
        out_shape=jax.ShapeDtypeStruct((NUM_CLASSES, Bp), jnp.float32),
        grid=(Bp // tb,),
        in_specs=[
            pl.BlockSpec((IN_FEATURES, tb), lambda i: (0, i)),          # x tile
            const_spec((NUM_UNITS, IN_FEATURES)),                       # w0 (30,20)
            const_spec((NUM_UNITS, 1)),                                 # b0
            const_spec((NUM_UNITS, NUM_UNITS)),                         # w1 (30,30)
            const_spec((NUM_UNITS, 1)),                                 # b1
            const_spec((NUM_CLASSES, NUM_UNITS)),                       # w2 (2,30)
            const_spec((NUM_CLASSES, 1)),                               # b2
        ],
        out_specs=pl.BlockSpec((NUM_CLASSES, tb), lambda i: (0, i)),
        compiler_params=pltpu.CompilerParams(
            dimension_semantics=("parallel",),
        ),
        cost_estimate=cost,
    )(
        x_t,
        params["w0"], params["b0"],
        params["w1"], params["b1"],
        params["w2"], params["b2"],
    )

    return jnp.transpose(out_t)[:B]                          # (B, 2)


def classifier_reference(x, params):
    """Pure-JAX reference (eval-mode dropout == identity)."""
    h0 = jnp.maximum(x @ params["w0"].T + params["b0"][:, 0], 0.0)
    h1 = jnp.maximum(h0 @ params["w1"].T + params["b1"][:, 0], 0.0)
    logits = h1 @ params["w2"].T + params["b2"][:, 0]
    return jax.nn.softmax(logits, axis=-1)


def init_params(key):
    """Deterministic synthetic parameters, PyTorch nn.Linear layout (out, in)."""
    k0, k1, k2, k3, k4, k5 = jax.random.split(key, 6)
    s0 = 1.0 / jnp.sqrt(IN_FEATURES)
    s1 = 1.0 / jnp.sqrt(NUM_UNITS)
    return {
        "w0": jax.random.uniform(k0, (NUM_UNITS, IN_FEATURES), jnp.float32, -s0, s0),
        "b0": jax.random.uniform(k1, (NUM_UNITS, 1), jnp.float32, -s0, s0),
        "w1": jax.random.uniform(k2, (NUM_UNITS, NUM_UNITS), jnp.float32, -s1, s1),
        "b1": jax.random.uniform(k3, (NUM_UNITS, 1), jnp.float32, -s1, s1),
        "w2": jax.random.uniform(k4, (NUM_CLASSES, NUM_UNITS), jnp.float32, -s1, s1),
        "b2": jax.random.uniform(k5, (NUM_CLASSES, 1), jnp.float32, -s1, s1),
    }


if __name__ == "__main__":
    key = jax.random.PRNGKey(0)
    kx, kp = jax.random.split(key)

    B = 8
    x = jax.random.normal(kx, (B, IN_FEATURES), dtype=jnp.float32)
    params = init_params(kp)

    out = classifier_forward(x, params)
    out = jax.block_until_ready(out)

    ref = classifier_reference(x, params)

    assert out.shape == (B, NUM_CLASSES)
    assert bool(jnp.allclose(jnp.sum(out, axis=-1), 1.0, atol=1e-5))
    assert bool(jnp.allclose(out, ref, atol=1e-5, rtol=1e-5))

    print("KERNEL_OK")
</pallas_src>

<mosaic_0001>
module attributes {stable_mosaic.version = 11 : i64} {
  func.func @classifier_kernel(%arg0: i32, %arg1: memref<20x128xf32, #tpu.memory_space<vmem>>, %arg2: memref<30x20xf32, #tpu.memory_space<vmem>>, %arg3: memref<30x1xf32, #tpu.memory_space<vmem>>, %arg4: memref<30x30xf32, #tpu.memory_space<vmem>>, %arg5: memref<30x1xf32, #tpu.memory_space<vmem>>, %arg6: memref<2x30xf32, #tpu.memory_space<vmem>>, %arg7: memref<2x1xf32, #tpu.memory_space<vmem>>, %arg8: memref<2x128xf32, #tpu.memory_space<vmem>>) attributes {dimension_semantics = [#tpu.dimension_semantics<parallel>], iteration_bounds = array<i64: 1>, scalar_prefetch = 0 : i64, scratch_operands = 0 : i64, tpu.core_type = #tpu.core_type<tc>, window_params = [{transform_indices = @transform_0, window_bounds = array<i64: 20, 128>}, {pipeline_mode = #tpu.pipeline_mode<synchronous>, transform_indices = @transform_1, window_bounds = array<i64: 30, 20>}, {pipeline_mode = #tpu.pipeline_mode<synchronous>, transform_indices = @transform_2, window_bounds = array<i64: 30, 1>}, {pipeline_mode = #tpu.pipeline_mode<synchronous>, transform_indices = @transform_3, window_bounds = array<i64: 30, 30>}, {pipeline_mode = #tpu.pipeline_mode<synchronous>, transform_indices = @transform_4, window_bounds = array<i64: 30, 1>}, {pipeline_mode = #tpu.pipeline_mode<synchronous>, transform_indices = @transform_5, window_bounds = array<i64: 2, 30>}, {pipeline_mode = #tpu.pipeline_mode<synchronous>, transform_indices = @transform_6, window_bounds = array<i64: 2, 1>}, {transform_indices = @transform_7, window_bounds = array<i64: 2, 128>}]} {
    %c0 = arith.constant 0 : index
    %c0_0 = arith.constant 0 : index
    %0 = vector.load %arg1[%c0, %c0_0] : memref<20x128xf32, #tpu.memory_space<vmem>>, vector<20x128xf32>
    %c0_1 = arith.constant 0 : index
    %c0_2 = arith.constant 0 : index
    %1 = vector.load %arg2[%c0_1, %c0_2] : memref<30x20xf32, #tpu.memory_space<vmem>>, vector<30x20xf32>
    %cst = arith.constant dense<0.000000e+00> : vector<30x128xf32>
    %2 = tpu.matmul %1, %0, %cst {dimension_numbers = #tpu.dot_dimension_numbers<[1], [0], [0], [1], [0, 0, 1, 1], [], []>} : vector<30x20xf32>, vector<20x128xf32>, vector<30x128xf32> -> vector<30x128xf32>
    %c0_3 = arith.constant 0 : index
    %c0_4 = arith.constant 0 : index
    %3 = vector.load %arg3[%c0_3, %c0_4] : memref<30x1xf32, #tpu.memory_space<vmem>>, vector<30x1xf32>
    %4 = vector.broadcast %3 : vector<30x1xf32> to vector<30x128xf32>
    %5 = arith.addf %2, %4 : vector<30x128xf32>
    %cst_5 = arith.constant 0.000000e+00 : f32
    %6 = vector.broadcast %cst_5 : f32 to vector<30x128xf32>
    %7 = arith.maximumf %5, %6 : vector<30x128xf32>
    %c0_6 = arith.constant 0 : index
    %c0_7 = arith.constant 0 : index
    %8 = vector.load %arg4[%c0_6, %c0_7] : memref<30x30xf32, #tpu.memory_space<vmem>>, vector<30x30xf32>
    %cst_8 = arith.constant dense<0.000000e+00> : vector<30x128xf32>
    %9 = tpu.matmul %8, %7, %cst_8 {dimension_numbers = #tpu.dot_dimension_numbers<[1], [0], [0], [1], [0, 0, 1, 1], [], []>} : vector<30x30xf32>, vector<30x128xf32>, vector<30x128xf32> -> vector<30x128xf32>
    %c0_9 = arith.constant 0 : index
    %c0_10 = arith.constant 0 : index
    %10 = vector.load %arg5[%c0_9, %c0_10] : memref<30x1xf32, #tpu.memory_space<vmem>>, vector<30x1xf32>
    %11 = vector.broadcast %10 : vector<30x1xf32> to vector<30x128xf32>
    %12 = arith.addf %9, %11 : vector<30x128xf32>
    %cst_11 = arith.constant 0.000000e+00 : f32
    %13 = vector.broadcast %cst_11 : f32 to vector<30x128xf32>
    %14 = arith.maximumf %12, %13 : vector<30x128xf32>
    %c0_12 = arith.constant 0 : index
    %c0_13 = arith.constant 0 : index
    %15 = vector.load %arg6[%c0_12, %c0_13] : memref<2x30xf32, #tpu.memory_space<vmem>>, vector<2x30xf32>
    %cst_14 = arith.constant dense<0.000000e+00> : vector<2x128xf32>
    %16 = tpu.matmul %15, %14, %cst_14 {dimension_numbers = #tpu.dot_dimension_numbers<[1], [0], [0], [1], [0, 0, 1, 1], [], []>} : vector<2x30xf32>, vector<30x128xf32>, vector<2x128xf32> -> vector<2x128xf32>
    %c0_15 = arith.constant 0 : index
    %c0_16 = arith.constant 0 : index
    %17 = vector.load %arg7[%c0_15, %c0_16] : memref<2x1xf32, #tpu.memory_space<vmem>>, vector<2x1xf32>
    %18 = vector.broadcast %17 : vector<2x1xf32> to vector<2x128xf32>
    %19 = arith.addf %16, %18 : vector<2x128xf32>
    %20 = vector.extract_strided_slice %19 {offsets = [1, 0], sizes = [1, 128], strides = [1, 1]} : vector<2x128xf32> to vector<1x128xf32>
    %21 = vector.extract_strided_slice %19 {offsets = [0, 0], sizes = [1, 128], strides = [1, 1]} : vector<2x128xf32> to vector<1x128xf32>
    %22 = arith.subf %20, %21 : vector<1x128xf32>
    %cst_17 = arith.constant 0.000000e+00 : f32
    %23 = vector.broadcast %cst_17 : f32 to vector<1x128xf32>
    %24 = arith.subf %23, %22 : vector<1x128xf32>
    %25 = math.exp %24 : vector<1x128xf32>
    %cst_18 = arith.constant 1.000000e+00 : f32
    %26 = vector.broadcast %cst_18 : f32 to vector<1x128xf32>
    %27 = arith.addf %26, %25 : vector<1x128xf32>
    %cst_19 = arith.constant 1.000000e+00 : f32
    %28 = vector.broadcast %cst_19 : f32 to vector<1x128xf32>
    %29 = arith.divf %28, %27 : vector<1x128xf32>
    %cst_20 = arith.constant 1.000000e+00 : f32
    %30 = vector.broadcast %cst_20 : f32 to vector<1x128xf32>
    %31 = arith.subf %30, %29 : vector<1x128xf32>
    %32 = tpu.concatenate %31, %29 in 0 : vector<1x128xf32>, vector<1x128xf32> -> vector<2x128xf32>
    %c0_21 = arith.constant 0 : index
    %c0_22 = arith.constant 0 : index
    %33 = vector.load %arg8[%c0_21, %c0_22] : memref<2x128xf32, #tpu.memory_space<vmem>>, vector<2x128xf32>
    tpu.vector_store %arg8[%c0_21, %c0_22], %32 {strides = array<i32>} : memref<2x128xf32, #tpu.memory_space<vmem>>, vector<2x128xf32>,
    return
  }
  func.func @transform_0(%arg0: i32) -> (i32, i32) {
    %c0_i32 = arith.constant 0 : i32
    %c0_i32_0 = arith.constant 0 : i32
    return %c0_i32, %arg0 : i32, i32
  }
  func.func @transform_1(%arg0: i32) -> (i32, i32) {
    %c0_i32 = arith.constant 0 : i32
    %c0_i32_0 = arith.constant 0 : i32
    %c0_i32_1 = arith.constant 0 : i32
    return %c0_i32, %c0_i32_0 : i32, i32
  }
  func.func @transform_2(%arg0: i32) -> (i32, i32) {
    %c0_i32 = arith.constant 0 : i32
    %c0_i32_0 = arith.constant 0 : i32
    %c0_i32_1 = arith.constant 0 : i32
    return %c0_i32, %c0_i32_0 : i32, i32
  }
  func.func @transform_3(%arg0: i32) -> (i32, i32) {
    %c0_i32 = arith.constant 0 : i32
    %c0_i32_0 = arith.constant 0 : i32
    %c0_i32_1 = arith.constant 0 : i32
    return %c0_i32, %c0_i32_0 : i32, i32
  }
  func.func @transform_4(%arg0: i32) -> (i32, i32) {
    %c0_i32 = arith.constant 0 : i32
    %c0_i32_0 = arith.constant 0 : i32
    %c0_i32_1 = arith.constant 0 : i32
    return %c0_i32, %c0_i32_0 : i32, i32
  }
  func.func @transform_5(%arg0: i32) -> (i32, i32) {
    %c0_i32 = arith.constant 0 : i32
    %c0_i32_0 = arith.constant 0 : i32
    %c0_i32_1 = arith.constant 0 : i32
    return %c0_i32, %c0_i32_0 : i32, i32
  }
  func.func @transform_6(%arg0: i32) -> (i32, i32) {
    %c0_i32 = arith.constant 0 : i32
    %c0_i32_0 = arith.constant 0 : i32
    %c0_i32_1 = arith.constant 0 : i32
    return %c0_i32, %c0_i32_0 : i32, i32
  }
  func.func @transform_7(%arg0: i32) -> (i32, i32) {
    %c0_i32 = arith.constant 0 : i32
    %c0_i32_0 = arith.constant 0 : i32
    return %c0_i32, %arg0 : i32, i32
  }
}

</mosaic_0001>

<llo_original>
// kernel: classifier_forward.1
$region0: #{classifier_forward.1}
  #allocation0 [shape = 'u32[]', space=smem, size = 0x4, offset = 0x4, fixed_abs, tag = 'smem constant byte address 0x4 - core index']
  #allocation1 [shape = 'u32[144,128]{1,0:T(1,128)}', space=vmem, size = 0x12000, scoped, tag = 'internal scratch']
  %s0 = inlined_call_operand.vmem [shape: f32[20,128], index: 0, kind: input, shape index: {}]
  %s1 = inlined_call_operand.vmem [shape: f32[30,20], index: 1, kind: input, shape index: {}]
  %s2 = inlined_call_operand.vmem [shape: f32[30,1], index: 2, kind: input, shape index: {}]
  %s3 = inlined_call_operand.vmem [shape: f32[30,30], index: 3, kind: input, shape index: {}]
  %s4 = inlined_call_operand.vmem [shape: f32[30,1], index: 4, kind: input, shape index: {}]
  %s5 = inlined_call_operand.vmem [shape: f32[2,30], index: 5, kind: input, shape index: {}]
  %s6 = inlined_call_operand.vmem [shape: f32[2,1], index: 6, kind: input, shape index: {}]
  %s7 = inlined_call_operand.hbm [shape: f32[2,128], index: 7, kind: output, shape index: {}]
  %s8 = sld [smem:[#allocation0]]
  $region38: #{classifier_forward.1} parent=0
    _
  %s10 = ssub.s32 1, %s8
  %s11 = scalar_select 0, %s10, %s8
  $region1: #{classifier_forward.1} parent=0
    #allocation2 [shape = 'u8[1024]{0}', space=vmem, size = 0x400, scoped, tag = 'output window, operand 0, single buffered']
    #allocation3 [shape = 's32[1]{0}', space=sflag, size = 0x4, scoped, tag = 'scoped memory for classifier_forward.1']
    %12 = vsyncpa [#allocation3], 0
    // Predicated region
    $region2: #{classifier_forward.1} parent=1 // pred_check
      _
    $region3: #{classifier_forward.1} parent=1 // pred_check_branch
      %14 = sbr.rel (0) target = $region5
    $region4: #{classifier_forward.1} parent=1 // pred_region
      _
    $region5: #{classifier_forward.1} parent=1 // pred_fallthru
      _
    // Predicated region
    $region6: #{classifier_forward.1} parent=1 // pred_check
      _
    $region7: #{classifier_forward.1} parent=1 // pred_check_branch
      %16 = sbr.rel (0) target = $region9
    $region8: #{classifier_forward.1} parent=1 // pred_region
      _
    $region9: #{classifier_forward.1} parent=1 // pred_fallthru
      _
    // Predicated region
    $region10: #{classifier_forward.1} parent=1 // pred_check
      _
    $region11: #{classifier_forward.1} parent=1 // pred_check_branch
      %18 = sbr.rel (0) target = $region13
    $region12: #{classifier_forward.1} parent=1 // pred_region
      _
    $region13: #{classifier_forward.1} parent=1 // pred_fallthru
      _
    // Predicated region
    $region14: #{classifier_forward.1} parent=1 // pred_check
      _
    $region15: #{classifier_forward.1} parent=1 // pred_check_branch
      %20 = sbr.rel (0) target = $region17
    $region16: #{classifier_forward.1} parent=1 // pred_region
      _
    $region17: #{classifier_forward.1} parent=1 // pred_fallthru
      _
    // Predicated region
    $region18: #{classifier_forward.1} parent=1 // pred_check
      _
    $region19: #{classifier_forward.1} parent=1 // pred_check_branch
      %22 = sbr.rel (0) target = $region21
    $region20: #{classifier_forward.1} parent=1 // pred_region
      _
    $region21: #{classifier_forward.1} parent=1 // pred_fallthru
      _
    // Predicated region
    $region22: #{classifier_forward.1} parent=1 // pred_check
      _
    $region23: #{classifier_forward.1} parent=1 // pred_check_branch
      %24 = sbr.rel (0) target = $region25
    $region24: #{classifier_forward.1} parent=1 // pred_region
      _
    $region25: #{classifier_forward.1} parent=1 // pred_fallthru
      _
    // Predicated region
    $region26: #{classifier_forward.1} parent=1 // pred_check
      _
    $region27: #{classifier_forward.1} parent=1 // pred_check_branch
      %26 = sbr.rel (0) target = $region29
    $region28: #{classifier_forward.1} parent=1 // pred_region
      _
    $region29: #{classifier_forward.1} parent=1 // pred_fallthru
      _
    %v27 = vld [vmem:[%s0] sm:$0xff]
    %v28 = vld [vmem:[%s0 + $0x8] sm:$0xff]
    %v29 = vld [vmem:[%s0 + $0x10] sm:$0xf]
    %v30 = vld [vmem:[%s1] sm:$0xff]
    %v31 = vld [vmem:[%s1 + $0x8] sm:$0xff]
    %v32 = vld [vmem:[%s1 + $0x10] sm:$0xff]
    %v33 = vld [vmem:[%s1 + $0x18] sm:$0x3f]
    %v34 = vld [vmem:[%s2] sm:$0xff]
    %v35 = vld [vmem:[%s2 + $0x8] sm:$0xff]
    %v36 = vld [vmem:[%s2 + $0x10] sm:$0xff]
    %v37 = vld [vmem:[%s2 + $0x18] sm:$0x3f]
    %39 = vset.pattern.permute.xlu0 0
    %40 = vperm.xlu0 %39, %v34
    %v41 = vpop.permute.xlu0 %40
    %44 = vset.pattern.permute.xlu0 0
    %45 = vperm.xlu0 %44, %v35
    %v46 = vpop.permute.xlu0 %45
    %49 = vset.pattern.permute.xlu0 0
    %50 = vperm.xlu0 %49, %v36
    %v51 = vpop.permute.xlu0 %50
    %54 = vset.pattern.permute.xlu0 0
    %55 = vperm.xlu0 %54, %v37
    %v56 = vpop.permute.xlu0 %55
    %vm58 = vcmask 162816
    %v60 = vsel %vm58, %v30, 0
    %v63 = vsel %vm58, %v31, 0
    %v66 = vsel %vm58, %v32, 0
    %v69 = vsel %vm58, %v33, 0
    %vm71 = vcmask 1043456
    %v73 = vsel %vm71, %v29, 0
    %75 = vmatprep.subr.mxu0 0.0
    %76 = vmatpush1.msra.mxu0 0.0
    %77 = vmatprep.subr.mxu0 0.0
    %78 = vmatpush1.msra.mxu0 0.0
    %79 = vmatprep.subr.mxu0 0.0
    %80 = vmatpush1.msra.mxu0 0.0
    %81 = vmatprep.subr.mxu0 0.0
    %82 = vmatpush1.msra.mxu0 0.0
    %83 = vmatprep.subr.mxu0 0.0
    %84 = vmatpush1.msra.mxu0 0.0
    %85 = vmatprep.subr.mxu0 0.0
    %86 = vmatpush1.msra.mxu0 0.0
    %87 = vmatprep.subr.mxu0 0.0
    %88 = vmatpush1.msra.mxu0 0.0
    %89 = vmatprep.subr.mxu0 0.0
    %90 = vmatpush1.msra.mxu0 0.0
    %91 = vmatprep.subr.mxu0 0.0
    %92 = vmatpush1.msra.mxu0 0.0
    %93 = vmatprep.subr.mxu0 0.0
    %94 = vmatpush1.msra.mxu0 0.0
    %95 = vmatprep.subr.mxu0 0.0
    %96 = vmatpush1.msra.mxu0 0.0
    %97 = vmatprep.subr.mxu0 0.0
    %98 = vmatpush1.msra.mxu0 0.0
    %99 = vmatprep.subr.mxu0 0.0
    %100 = vmatpush1.msra.mxu0 0.0
    %101 = vmatprep.subr.mxu0 0.0
    %102 = vmatpush1.msra.mxu0 %v73
    %103 = vmatprep.subr.mxu0 0.0
    %104 = vmatpush1.msra.mxu0 %v28
    %105 = vmatprep.subr.mxu0 0.0
    %106 = vmatpush1.msra.mxu0 %v27
    %107 = vmatprep.subr.mxu0 0.0
    %108 = vmatpush2.msra.mxu0 0.0
    %109 = vmatprep.subr.mxu0 0.0
    %110 = vmatpush2.msra.mxu0 0.0
    %111 = vmatprep.subr.mxu0 0.0
    %112 = vmatpush2.msra.mxu0 0.0
    %113 = vmatprep.subr.mxu0 0.0
    %114 = vmatpush2.msra.mxu0 0.0
    %115 = vmatprep.subr.mxu0 0.0
    %116 = vmatpush2.msra.mxu0 0.0
    %117 = vmatprep.subr.mxu0 0.0
    %118 = vmatpush2.msra.mxu0 0.0
    %119 = vmatprep.subr.mxu0 0.0
    %120 = vmatpush2.msra.mxu0 0.0
    %121 = vmatprep.subr.mxu0 0.0
    %122 = vmatpush2.msra.mxu0 0.0
    %123 = vmatprep.subr.mxu0 0.0
    %124 = vmatpush2.msra.mxu0 0.0
    %125 = vmatprep.subr.mxu0 0.0
    %126 = vmatpush2.msra.mxu0 0.0
    %127 = vmatprep.subr.mxu0 0.0
    %128 = vmatpush2.msra.mxu0 0.0
    %129 = vmatprep.subr.mxu0 0.0
    %130 = vmatpush2.msra.mxu0 0.0
    %131 = vmatprep.subr.mxu0 0.0
    %132 = vmatpush2.msra.mxu0 0.0
    %133 = vmatprep.subr.mxu0 0.0
    %134 = vmatpush2.msra.mxu0 0.0
    %135 = vmatprep.subr.mxu0 0.0
    %136 = vmatpush2.msra.mxu0 0.0
    %137 = vmatprep.subr.mxu0 0.0
    %138 = vmatpush2.msra.mxu0 0.0
    %139 = vmatprep.mubr.f32.mxu0 0.0
    %140 = vmatmul.mubr.f32.gmra.mxu0 %v60
    %v141 = vpop.f32.mrf.mxu0
    %v142 = vadd.f32 %v41, %v141
    %v143 = vpop.f32.mrf.mxu0
    %144 = vmatprep.mubr.f32.mxu0 0.0
    %145 = vmatmul.mubr.f32.gmra.mxu0 %v63
    %v146 = vpop.f32.mrf.mxu0
    %v147 = vadd.f32 %v46, %v146
    %v148 = vpop.f32.mrf.mxu0
    %149 = vmatprep.mubr.f32.mxu0 0.0
    %150 = vmatmul.mubr.f32.gmra.mxu0 %v66
    %v151 = vpop.f32.mrf.mxu0
    %v152 = vadd.f32 %v51, %v151
    %v153 = vpop.f32.mrf.mxu0
    %154 = vmatprep.mubr.f32.mxu0 0.0
    %155 = vmatmul.mubr.f32.gmra.mxu0 %v69
    %v156 = vpop.f32.mrf.mxu0
    %v157 = vadd.f32 %v56, %v156
    %v158 = vpop.f32.mrf.mxu0
    %159 = vdwg.mxu0
    %v160 = vmax.f32 %v142, 0.0
    %v161 = vmax.f32 %v147, 0.0
    %v162 = vmax.f32 %v152, 0.0
    %v163 = vmax.f32 %v157, 0.0
    %v164 = vld [vmem:[%s3] sm:$0xff]
    %v165 = vld [vmem:[%s3 + $0x8] sm:$0xff]
    %v166 = vld [vmem:[%s3 + $0x10] sm:$0xff]
    %v167 = vld [vmem:[%s3 + $0x18] sm:$0x3f]
    %v168 = vld [vmem:[%s4] sm:$0xff]
    %v169 = vld [vmem:[%s4 + $0x8] sm:$0xff]
    %v170 = vld [vmem:[%s4 + $0x10] sm:$0xff]
    %v171 = vld [vmem:[%s4 + $0x18] sm:$0x3f]
    %173 = vset.pattern.permute.xlu0 0
    %174 = vperm.xlu0 %173, %v168
    %v175 = vpop.permute.xlu0 %174
    %178 = vset.pattern.permute.xlu0 0
    %179 = vperm.xlu0 %178, %v169
    %v180 = vpop.permute.xlu0 %179
    %183 = vset.pattern.permute.xlu0 0
    %184 = vperm.xlu0 %183, %v170
    %v185 = vpop.permute.xlu0 %184
    %188 = vset.pattern.permute.xlu0 0
    %189 = vperm.xlu0 %188, %v171
    %v190 = vpop.permute.xlu0 %189
    %vm192 = vcmask 244736
    %v194 = vsel %vm192, %v164, 0
    %v197 = vsel %vm192, %v165, 0
    %v200 = vsel %vm192, %v166, 0
    %v203 = vsel %vm192, %v167, 0
    %vm205 = vcmask 1045504
    %v207 = vsel %vm205, %v163, 0
    %209 = vmatprep.subr.mxu0 0.0
    %210 = vmatpush1.msra.mxu0 0.0
    %211 = vmatprep.subr.mxu0 0.0
    %212 = vmatpush1.msra.mxu0 0.0
    %213 = vmatprep.subr.mxu0 0.0
    %214 = vmatpush1.msra.mxu0 0.0
    %215 = vmatprep.subr.mxu0 0.0
    %216 = vmatpush1.msra.mxu0 0.0
    %217 = vmatprep.subr.mxu0 0.0
    %218 = vmatpush1.msra.mxu0 0.0
    %219 = vmatprep.subr.mxu0 0.0
    %220 = vmatpush1.msra.mxu0 0.0
    %221 = vmatprep.subr.mxu0 0.0
    %222 = vmatpush1.msra.mxu0 0.0
    %223 = vmatprep.subr.mxu0 0.0
    %224 = vmatpush1.msra.mxu0 0.0
    %225 = vmatprep.subr.mxu0 0.0
    %226 = vmatpush1.msra.mxu0 0.0
    %227 = vmatprep.subr.mxu0 0.0
    %228 = vmatpush1.msra.mxu0 0.0
    %229 = vmatprep.subr.mxu0 0.0
    %230 = vmatpush1.msra.mxu0 0.0
    %231 = vmatprep.subr.mxu0 0.0
    %232 = vmatpush1.msra.mxu0 0.0
    %233 = vmatprep.subr.mxu0 0.0
    %234 = vmatpush1.msra.mxu0 %v207
    %235 = vmatprep.subr.mxu0 0.0
    %236 = vmatpush1.msra.mxu0 %v162
    %237 = vmatprep.subr.mxu0 0.0
    %238 = vmatpush1.msra.mxu0 %v161
    %239 = vmatprep.subr.mxu0 0.0
    %240 = vmatpush1.msra.mxu0 %v160
    %241 = vmatprep.subr.mxu0 0.0
    %242 = vmatpush2.msra.mxu0 0.0
    %243 = vmatprep.subr.mxu0 0.0
    %244 = vmatpush2.msra.mxu0 0.0
    %245 = vmatprep.subr.mxu0 0.0
    %246 = vmatpush2.msra.mxu0 0.0
    %247 = vmatprep.subr.mxu0 0.0
    %248 = vmatpush2.msra.mxu0 0.0
    %249 = vmatprep.subr.mxu0 0.0
    %250 = vmatpush2.msra.mxu0 0.0
    %251 = vmatprep.subr.mxu0 0.0
    %252 = vmatpush2.msra.mxu0 0.0
    %253 = vmatprep.subr.mxu0 0.0
    %254 = vmatpush2.msra.mxu0 0.0
    %255 = vmatprep.subr.mxu0 0.0
    %256 = vmatpush2.msra.mxu0 0.0
    %257 = vmatprep.subr.mxu0 0.0
    %258 = vmatpush2.msra.mxu0 0.0
    %259 = vmatprep.subr.mxu0 0.0
    %260 = vmatpush2.msra.mxu0 0.0
    %261 = vmatprep.subr.mxu0 0.0
    %262 = vmatpush2.msra.mxu0 0.0
    %263 = vmatprep.subr.mxu0 0.0
    %264 = vmatpush2.msra.mxu0 0.0
    %265 = vmatprep.subr.mxu0 0.0
    %266 = vmatpush2.msra.mxu0 0.0
    %267 = vmatprep.subr.mxu0 0.0
    %268 = vmatpush2.msra.mxu0 0.0
    %269 = vmatprep.subr.mxu0 0.0
    %270 = vmatpush2.msra.mxu0 0.0
    %271 = vmatprep.subr.mxu0 0.0
    %272 = vmatpush2.msra.mxu0 0.0
    %273 = vmatprep.mubr.f32.mxu0 0.0
    %274 = vmatmul.mubr.f32.gmra.mxu0 %v194
    %v275 = vpop.f32.mrf.mxu0
    %v276 = vadd.f32 %v175, %v275
    %v277 = vpop.f32.mrf.mxu0
    %278 = vmatprep.mubr.f32.mxu0 0.0
    %279 = vmatmul.mubr.f32.gmra.mxu0 %v197
    %v280 = vpop.f32.mrf.mxu0
    %v281 = vadd.f32 %v180, %v280
    %v282 = vpop.f32.mrf.mxu0
    %283 = vmatprep.mubr.f32.mxu0 0.0
    %284 = vmatmul.mubr.f32.gmra.mxu0 %v200
    %v285 = vpop.f32.mrf.mxu0
    %v286 = vadd.f32 %v185, %v285
    %v287 = vpop.f32.mrf.mxu0
    %288 = vmatprep.mubr.f32.mxu0 0.0
    %289 = vmatmul.mubr.f32.gmra.mxu0 %v203
    %v290 = vpop.f32.mrf.mxu0
    %v291 = vadd.f32 %v190, %v290
    %v292 = vpop.f32.mrf.mxu0
    %293 = vdwg.mxu0
    %v294 = vmax.f32 %v276, 0.0
    %v295 = vmax.f32 %v281, 0.0
    %v296 = vmax.f32 %v286, 0.0
    %v297 = vmax.f32 %v291, 0.0
    %v298 = vld [vmem:[%s5] sm:$0x3]
    %v299 = vld [vmem:[%s6] sm:$0x3]
    %301 = vset.pattern.permute.xlu0 0
    %302 = vperm.xlu0 %301, %v299
    %v303 = vpop.permute.xlu0 %302
    %v306 = vsel %vm192, %v298, 0
    %v309 = vsel %vm205, %v297, 0
    %311 = vmatprep.subr.mxu0 0.0
    %312 = vmatpush1.msra.mxu0 0.0
    %313 = vmatprep.subr.mxu0 0.0
    %314 = vmatpush1.msra.mxu0 0.0
    %315 = vmatprep.subr.mxu0 0.0
    %316 = vmatpush1.msra.mxu0 0.0
    %317 = vmatprep.subr.mxu0 0.0
    %318 = vmatpush1.msra.mxu0 0.0
    %319 = vmatprep.subr.mxu0 0.0
    %320 = vmatpush1.msra.mxu0 0.0
    %321 = vmatprep.subr.mxu0 0.0
    %322 = vmatpush1.msra.mxu0 0.0
    %323 = vmatprep.subr.mxu0 0.0
    %324 = vmatpush1.msra.mxu0 0.0
    %325 = vmatprep.subr.mxu0 0.0
    %326 = vmatpush1.msra.mxu0 0.0
    %327 = vmatprep.subr.mxu0 0.0
    %328 = vmatpush1.msra.mxu0 0.0
    %329 = vmatprep.subr.mxu0 0.0
    %330 = vmatpush1.msra.mxu0 0.0
    %331 = vmatprep.subr.mxu0 0.0
    %332 = vmatpush1.msra.mxu0 0.0
    %333 = vmatprep.subr.mxu0 0.0
    %334 = vmatpush1.msra.mxu0 0.0
    %335 = vmatprep.subr.mxu0 0.0
    %336 = vmatpush1.msra.mxu0 %v309
    %337 = vmatprep.subr.mxu0 0.0
    %338 = vmatpush1.msra.mxu0 %v296
    %339 = vmatprep.subr.mxu0 0.0
    %340 = vmatpush1.msra.mxu0 %v295
    %341 = vmatprep.subr.mxu0 0.0
    %342 = vmatpush1.msra.mxu0 %v294
    %343 = vmatprep.subr.mxu0 0.0
    %344 = vmatpush2.msra.mxu0 0.0
    %345 = vmatprep.subr.mxu0 0.0
    %346 = vmatpush2.msra.mxu0 0.0
    %347 = vmatprep.subr.mxu0 0.0
    %348 = vmatpush2.msra.mxu0 0.0
    %349 = vmatprep.subr.mxu0 0.0
    %350 = vmatpush2.msra.mxu0 0.0
    %351 = vmatprep.subr.mxu0 0.0
    %352 = vmatpush2.msra.mxu0 0.0
    %353 = vmatprep.subr.mxu0 0.0
    %354 = vmatpush2.msra.mxu0 0.0
    %355 = vmatprep.subr.mxu0 0.0
    %356 = vmatpush2.msra.mxu0 0.0
    %357 = vmatprep.subr.mxu0 0.0
    %358 = vmatpush2.msra.mxu0 0.0
    %359 = vmatprep.subr.mxu0 0.0
    %360 = vmatpush2.msra.mxu0 0.0
    %361 = vmatprep.subr.mxu0 0.0
    %362 = vmatpush2.msra.mxu0 0.0
    %363 = vmatprep.subr.mxu0 0.0
    %364 = vmatpush2.msra.mxu0 0.0
    %365 = vmatprep.subr.mxu0 0.0
    %366 = vmatpush2.msra.mxu0 0.0
    %367 = vmatprep.subr.mxu0 0.0
    %368 = vmatpush2.msra.mxu0 0.0
    %369 = vmatprep.subr.mxu0 0.0
    %370 = vmatpush2.msra.mxu0 0.0
    %371 = vmatprep.subr.mxu0 0.0
    %372 = vmatpush2.msra.mxu0 0.0
    %373 = vmatprep.subr.mxu0 0.0
    %374 = vmatpush2.msra.mxu0 0.0
    %375 = vmatprep.mubr.f32.mxu0 0.0
    %376 = vmatmul.mubr.f32.gmra.mxu0 %v306
    %v377 = vpop.f32.mrf.mxu0
    %v378 = vadd.f32 %v303, %v377
    %v379 = vpop.f32.mrf.mxu0
    %380 = vdwg.mxu0
    %v382 = vrot.slane %v378, 7
    %v384 = vsub.f32 %v378, %v382
    %v385 = vsub.f32 0.0, %v384
    %v386 = vmul.f32 %v385, 1.442695
    %v387 = vpow.pop %v386
    %v388 = vadd.f32 %v387, 1.0
    %v389 = vrcp.pop %v388
    %v390 = vmul.f32 1.0, %v389
    %v391 = vsub.f32 1.0, %v390
    %v393 = vrot.slane %v391, 1
    %vm395 = vcmask 1040384
    %v396 = vsel %vm395, %v393, %v390
    %397 = vst [vmem:[#allocation2] sm:$0x3] %v396
    // Predicated region
    $region30: #{classifier_forward.1} parent=1 // pred_check
      _
    $region31: #{classifier_forward.1} parent=1 // pred_check_branch
      %399 = sbr.rel (0) target = $region33
    $region32: #{classifier_forward.1} parent=1 // pred_region
      %s401 = ssub.s32 32, 32
      %402 = vsyncadd [#allocation3], %s401
      %s404 = sshll.u32 [#allocation2], 4
      %s405 = int_to_ptr.vmem [resolvable:$true] %s404
      %407 = dma.vmem_to_hbm [thread:$0]  %s405, 32, %s7, [#allocation3]
    $region33: #{classifier_forward.1} parent=1 // pred_fallthru
      _
    // Predicated region
    $region34: #{classifier_forward.1} parent=1 // pred_check
      _
    $region35: #{classifier_forward.1} parent=1 // pred_check_branch
      %409 = sbr.rel (0) target = $region37
    $region36: #{classifier_forward.1} parent=1 // pred_region
      %410 = dma.done [#allocation3], 32
    $region37: #{classifier_forward.1} parent=1 // pred_fallthru
      _
    %411 = vsyncpa [#allocation3], 1

</llo_original>
